<compile_context>
chip_gen: v7x
topology: tpu7x:2x2x1
jax: 0.10.0
libtpu: 0.0.40
codegen_flags: <defaults>
</compile_context>

<pallas_src>
import jax
import jax.numpy as jnp
from jax.experimental import pallas as pl
from jax.experimental.pallas import tpu as pltpu

_MIB = 1024 * 1024


# ---------------------------------------------------------------------------
# Tiling helpers
# ---------------------------------------------------------------------------
def _sublane_align(dtype) -> int:
    # Second-to-last dim alignment: 8 sublanes of 32-bit; narrower dtypes pack
    # along sublanes (bf16 -> 16, int8/fp8 -> 32).
    return {4: 8, 2: 16, 1: 32}.get(jnp.dtype(dtype).itemsize, 8)


def _choose_tile(dim, target, align, *, full_cap=None):
    """Return (tile, padded_dim) for one axis.

    - dim <= target: use the full extent (always a legal block, no padding).
    - dim <= full_cap and align-multiple: still use the full extent (wider
      lane-dense tile, operand read exactly once along this axis).
    - else: largest align-multiple tile in [max(align, target//2), target]
      that divides `dim` exactly (no padding, never degenerate-small).
    - else: fall back to `target` + one-time zero padding.
    """
    if dim <= target:
        return dim, dim
    if full_cap is not None and dim <= full_cap and dim % align == 0:
        return dim, dim
    floor = max(align, target // 2)
    t = target
    while t >= floor:
        if dim % t == 0:
            return t, dim
        t -= align
    return target, pl.cdiv(dim, target) * target


# ---------------------------------------------------------------------------
# Kernel factory
# ---------------------------------------------------------------------------
def _make_linear_kernel(has_bias: bool, direct_acc: bool):
    """Tiled matmul kernel.

    Ref order: x (tm, tk), w (tk, tn), [bias (1, tn)], out (tm, tn),
    [acc (tm, tn) f32 scratch].  The output block is resident across the
    k (reduction) grid axis; for f32 outputs we accumulate straight into it
    (direct_acc=True) and skip the separate scratch tile entirely.
    """

    def kernel(*refs):
        if has_bias:
            x_ref, w_ref, b_ref, o_ref, *rest = refs
        else:
            x_ref, w_ref, o_ref, *rest = refs
            b_ref = None
        acc_ref = o_ref if direct_acc else rest[0]

        k = pl.program_id(2)

        @pl.when(k == 0)
        def _init():
            acc_ref[...] = jnp.zeros_like(acc_ref)

        acc_ref[...] += jnp.dot(x_ref[...], w_ref[...],
                                preferred_element_type=jnp.float32)

        if has_bias or not direct_acc:
            @pl.when(k == pl.num_programs(2) - 1)
            def _finalize():
                acc = acc_ref[...]
                if has_bias:
                    acc = acc + b_ref[...]
                o_ref[...] = acc.astype(o_ref.dtype)

    return kernel


# ---------------------------------------------------------------------------
# Wrapper
# ---------------------------------------------------------------------------
def linear_pallas(x, weight_t, bias=None, *, out_features=None,
                  tm=512, tn=512, tk=1024):
    """y = x @ W^T (+ bias).

    `weight_t` is the pre-transposed weight, laid out (K_pad, N_pad) — it may
    already be padded (done once at module init).  `bias` is (1, N_pad) or
    None.  `out_features` gives the true N.
    """
    orig_shape = x.shape
    K = orig_shape[-1]
    N = int(out_features) if out_features is not None else weight_t.shape[1]

    x2 = x.reshape(-1, K)
    M = x2.shape[0]
    m_align = _sublane_align(x.dtype)

    tm_e, M_pad = _choose_tile(M, tm, m_align)
    tn_e, N_pad = _choose_tile(N, tn, 128, full_cap=1024)
    tk_e, K_pad = _choose_tile(K, tk, 128, full_cap=1024)

    # Weight/bias padding is normally done once at module init; this is only a
    # fallback for raw (K, N) weights passed directly.
    w2 = weight_t
    if w2.shape != (K_pad, N_pad):
        assert w2.shape == (K, N), f"unexpected weight shape {w2.shape}"
        w2 = jnp.pad(w2, ((0, K_pad - K), (0, N_pad - N)))
    b2 = None
    if bias is not None:
        b2 = bias.reshape(1, -1)
        if b2.shape[1] != N_pad:
            b2 = jnp.pad(b2, ((0, 0), (0, N_pad - b2.shape[1])))

    if M_pad != M or K_pad != K:
        x2 = jnp.pad(x2, ((0, M_pad - M), (0, K_pad - K)))

    # v7x has 2 TensorCores: keep at least one *parallel* grid axis >= 2 blocks
    # on non-trivial problems instead of collapsing to a 1x1xK grid.
    if (M_pad // tm_e == 1 and N_pad // tn_e == 1
            and M_pad * N_pad >= 2 * 128 * 128):
        if tn_e % 256 == 0:
            tn_e //= 2
        elif tm_e % (2 * m_align) == 0:
            tm_e //= 2

    grid = (M_pad // tm_e, N_pad // tn_e, K_pad // tk_e)

    out_dtype = x.dtype
    direct_acc = jnp.dtype(out_dtype) == jnp.dtype(jnp.float32)
    has_bias = b2 is not None

    x_spec = pl.BlockSpec((tm_e, tk_e), lambda i, j, k: (i, k))
    # TODO(synk): add pipeline_mode=pl.Buffered(3) on w_spec if profiles show
    # exposed weight-DMA waits once the kernel is otherwise compute-bound.
    w_spec = pl.BlockSpec((tk_e, tn_e), lambda i, j, k: (k, j))
    o_spec = pl.BlockSpec((tm_e, tn_e), lambda i, j, k: (i, j))
    in_specs = [x_spec, w_spec]
    operands = [x2, w2]
    if has_bias:
        in_specs.append(pl.BlockSpec((1, tn_e), lambda i, j, k: (0, j)))
        operands.append(b2)

    scratch = [] if direct_acc else [pltpu.VMEM((tm_e, tn_e), jnp.float32)]

    in_item = jnp.dtype(x.dtype).itemsize
    w_item = jnp.dtype(w2.dtype).itemsize
    out_item = jnp.dtype(out_dtype).itemsize

    # VMEM budget: double-buffered x/w/bias/out (+ optional acc) with headroom,
    # capped at 48 MiB so the same config is safe on v7x's 64 MiB VMEM.
    need = 2 * (tm_e * tk_e * in_item + tk_e * tn_e * w_item
                + tm_e * tn_e * out_item
                + (tn_e * jnp.dtype(b2.dtype).itemsize if has_bias else 0))
    if not direct_acc:
        need += tm_e * tn_e * 4
    vmem_limit = int(min(max(32 * _MIB, 2 * need), 48 * _MIB))

    # Bytes reflect the actual schedule: W re-read once per M-tile,
    # X re-read once per N-tile, output written once.
    cost = pl.CostEstimate(
        flops=2 * M_pad * K_pad * N_pad,
        transcendentals=0,
        bytes_accessed=(grid[0] * K_pad * N_pad * w_item
                        + grid[1] * M_pad * K_pad * in_item
                        + M_pad * N_pad * out_item),
    )

    out = pl.pallas_call(
        _make_linear_kernel(has_bias, direct_acc),
        out_shape=jax.ShapeDtypeStruct((M_pad, N_pad), out_dtype),
        grid_spec=pltpu.PrefetchScalarGridSpec(
            num_scalar_prefetch=0,
            grid=grid,
            in_specs=in_specs,
            out_specs=o_spec,
            scratch_shapes=scratch,
        ),
        compiler_params=pltpu.CompilerParams(
            dimension_semantics=("parallel", "parallel", "arbitrary"),
            vmem_limit_bytes=vmem_limit,
        ),
        cost_estimate=cost,
    )(*operands)

    if M_pad != M:
        out = out[:M]
    if N_pad != N:
        out = out[:, :N]
    return out.reshape(*orig_shape[:-1], N)


# ---------------------------------------------------------------------------
# Module mirroring the PyTorch Linear (__init__: weight ~ N(0,1), bias ~ N(0,1))
# ---------------------------------------------------------------------------
class LinearPallas:
    def __init__(self, in_features: int, out_features: int, bias=True, *, key,
                 param_dtype=jnp.float32, tn=512, tk=1024):
        kw, kb = jax.random.split(key)
        self.in_features = in_features
        self.out_features = out_features

        weight = jax.random.normal(kw, (out_features, in_features),
                                   dtype=jnp.float32)
        b = (jax.random.normal(kb, (out_features,), dtype=jnp.float32)
             if bias else None)

        # Pre-transpose AND pre-pad the weight ONCE at init, so the forward
        # pass never does a per-call weight.T or ragged-shape weight padding
        # (both would be full K*N HBM round trips).  Only the padded copy is
        # kept resident (no duplicate weight footprint).
        # TODO(synk): set param_dtype=jnp.bfloat16 to halve weight DMA and use
        # the bf16 MXU path when exact f32 parity with PyTorch is not needed.
        tn_e, N_pad = _choose_tile(out_features, tn, 128, full_cap=1024)
        tk_e, K_pad = _choose_tile(in_features, tk, 128, full_cap=1024)
        w_t = jnp.asarray(weight.T, dtype=param_dtype)
        if (K_pad, N_pad) != (in_features, out_features):
            w_t = jnp.pad(w_t, ((0, K_pad - in_features),
                                (0, N_pad - out_features)))
        self.weight_t = w_t  # (K_pad, N_pad)

        self.bias = None
        if b is not None:
            b2 = b.reshape(1, -1).astype(jnp.float32)
            if N_pad != out_features:
                b2 = jnp.pad(b2, ((0, 0), (0, N_pad - out_features)))
            self.bias = b2  # (1, N_pad)

    def __call__(self, x):
        return linear_pallas(x, self.weight_t, self.bias,
                             out_features=self.out_features)

    # Unpadded reference views (PyTorch layout) for testing only.
    @property
    def weight_ref(self):
        return self.weight_t[:self.in_features, :self.out_features].T.astype(
            jnp.float32)

    @property
    def bias_ref(self):
        if self.bias is None:
            return None
        return self.bias[0, :self.out_features].astype(jnp.float32)


def _ref_linear(x, mod):
    y = jnp.dot(x.reshape(-1, x.shape[-1]), mod.weight_ref.T,
                precision=jax.lax.Precision.HIGHEST)
    if mod.bias_ref is not None:
        y = y + mod.bias_ref
    return y.reshape(*x.shape[:-1], mod.out_features)


if __name__ == "__main__":
    key = jax.random.PRNGKey(0)
    k1, kx1, k2, kx2, k3, kx3 = jax.random.split(key, 6)

    # --- Small shape consistent with the module (batch=2, seq=8, hidden=32) ---
    batch, seq, in_features, out_features = 2, 8, 32, 64
    mod = LinearPallas(in_features, out_features, bias=True, key=k1)
    x = jax.random.normal(kx1, (batch, seq, in_features), dtype=jnp.float32)
    y = jax.block_until_ready(mod(x))
    assert y.shape == (batch, seq, out_features)
    assert jnp.allclose(y, _ref_linear(x, mod), atol=1e-4, rtol=1e-4)

    # --- Multi-tile (i, j) case: full-extent K/N, split M for dual-TC use ---
    mod2 = LinearPallas(1024, 384, bias=True, key=k2)
    x2 = jax.random.normal(kx2, (2, 256, 1024), dtype=jnp.float32)
    y2 = jax.block_until_ready(mod2(x2))
    assert y2.shape == (2, 256, 384)
    assert jnp.allclose(y2, _ref_linear(x2, mod2), atol=1e-2, rtol=1e-4)

    # --- K-reduction case (grid k extent > 1, direct accumulation into o_ref) ---
    mod3 = LinearPallas(3072, 384, bias=True, key=k3)
    x3 = jax.random.normal(kx3, (2, 128, 3072), dtype=jnp.float32)
    y3 = jax.block_until_ready(mod3(x3))
    assert y3.shape == (2, 128, 384)
    assert jnp.allclose(y3, _ref_linear(x3, mod3), atol=1e-2, rtol=1e-4)

    print("KERNEL_OK")
</pallas_src>

<mosaic_0001>
module attributes {stable_mosaic.version = 11 : i64} {
  func.func @kernel(%arg0: i32, %arg1: i32, %arg2: i32, %arg3: memref<16x32xf32, #tpu.memory_space<vmem>>, %arg4: memref<32x64xf32, #tpu.memory_space<vmem>>, %arg5: memref<1x64xf32, #tpu.memory_space<vmem>>, %arg6: memref<16x64xf32, #tpu.memory_space<vmem>>) attributes {dimension_semantics = [#tpu.dimension_semantics<parallel>, #tpu.dimension_semantics<parallel>, #tpu.dimension_semantics<arbitrary>], iteration_bounds = array<i64: 1, 1, 1>, scalar_prefetch = 0 : i64, scratch_operands = 0 : i64, tpu.core_type = #tpu.core_type<tc>, window_params = [{transform_indices = @transform_0, window_bounds = array<i64: 16, 32>}, {transform_indices = @transform_1, window_bounds = array<i64: 32, 64>}, {transform_indices = @transform_2, window_bounds = array<i64: 1, 64>}, {transform_indices = @transform_3, window_bounds = array<i64: 16, 64>}]} {
    %c0_i32 = arith.constant 0 : i32
    %0 = arith.cmpi eq, %arg2, %c0_i32 : i32
    %1 = arith.extui %0 : i1 to i32
    %c0_i32_0 = arith.constant 0 : i32
    %2 = arith.cmpi ne, %1, %c0_i32_0 : i32
    scf.if %2 {
      %cst_10 = arith.constant 0.000000e+00 : f32
      %12 = vector.broadcast %cst_10 : f32 to vector<16x64xf32>
      %c0_11 = arith.constant 0 : index
      %c0_12 = arith.constant 0 : index
      %13 = vector.load %arg6[%c0_11, %c0_12] : memref<16x64xf32, #tpu.memory_space<vmem>>, vector<16x64xf32>
      tpu.vector_store %arg6[%c0_11, %c0_12], %12 {strides = array<i32>} : memref<16x64xf32, #tpu.memory_space<vmem>>, vector<16x64xf32>,
    } else {
    }
    %c0 = arith.constant 0 : index
    %c0_1 = arith.constant 0 : index
    %3 = vector.load %arg6[%c0, %c0_1] : memref<16x64xf32, #tpu.memory_space<vmem>>, vector<16x64xf32>
    %c0_2 = arith.constant 0 : index
    %c0_3 = arith.constant 0 : index
    %4 = vector.load %arg3[%c0_2, %c0_3] : memref<16x32xf32, #tpu.memory_space<vmem>>, vector<16x32xf32>
    %c0_4 = arith.constant 0 : index
    %c0_5 = arith.constant 0 : index
    %5 = vector.load %arg4[%c0_4, %c0_5] : memref<32x64xf32, #tpu.memory_space<vmem>>, vector<32x64xf32>
    %cst = arith.constant dense<0.000000e+00> : vector<16x64xf32>
    %6 = tpu.matmul %4, %5, %cst {dimension_numbers = #tpu.dot_dimension_numbers<[1], [0], [0], [1], [0, 0, 1, 1], [], []>} : vector<16x32xf32>, vector<32x64xf32>, vector<16x64xf32> -> vector<16x64xf32>
    %7 = arith.addf %3, %6 : vector<16x64xf32>
    %c0_6 = arith.constant 0 : index
    %c0_7 = arith.constant 0 : index
    %8 = vector.load %arg6[%c0_6, %c0_7] : memref<16x64xf32, #tpu.memory_space<vmem>>, vector<16x64xf32>
    tpu.vector_store %arg6[%c0_6, %c0_7], %7 {strides = array<i32>} : memref<16x64xf32, #tpu.memory_space<vmem>>, vector<16x64xf32>,
    %c0_i32_8 = arith.constant 0 : i32
    %9 = arith.cmpi eq, %arg2, %c0_i32_8 : i32
    %10 = arith.extui %9 : i1 to i32
    %c0_i32_9 = arith.constant 0 : i32
    %11 = arith.cmpi ne, %10, %c0_i32_9 : i32
    scf.if %11 {
      %c0_10 = arith.constant 0 : index
      %c0_11 = arith.constant 0 : index
      %12 = vector.load %arg6[%c0_10, %c0_11] : memref<16x64xf32, #tpu.memory_space<vmem>>, vector<16x64xf32>
      %c0_12 = arith.constant 0 : index
      %c0_13 = arith.constant 0 : index
      %13 = vector.load %arg5[%c0_12, %c0_13] : memref<1x64xf32, #tpu.memory_space<vmem>>, vector<1x64xf32>
      %14 = vector.broadcast %13 : vector<1x64xf32> to vector<16x64xf32>
      %15 = arith.addf %12, %14 : vector<16x64xf32>
      %c0_14 = arith.constant 0 : index
      %c0_15 = arith.constant 0 : index
      %16 = vector.load %arg6[%c0_14, %c0_15] : memref<16x64xf32, #tpu.memory_space<vmem>>, vector<16x64xf32>
      tpu.vector_store %arg6[%c0_14, %c0_15], %15 {strides = array<i32>} : memref<16x64xf32, #tpu.memory_space<vmem>>, vector<16x64xf32>,
    } else {
    }
    return
  }
  func.func @transform_0(%arg0: i32, %arg1: i32, %arg2: i32) -> (i32, i32) {
    %c0_i32 = arith.constant 0 : i32
    return %arg0, %arg2 : i32, i32
  }
  func.func @transform_1(%arg0: i32, %arg1: i32, %arg2: i32) -> (i32, i32) {
    %c0_i32 = arith.constant 0 : i32
    return %arg2, %arg1 : i32, i32
  }
  func.func @transform_2(%arg0: i32, %arg1: i32, %arg2: i32) -> (i32, i32) {
    %c0_i32 = arith.constant 0 : i32
    %c0_i32_0 = arith.constant 0 : i32
    return %c0_i32, %arg1 : i32, i32
  }
  func.func @transform_3(%arg0: i32, %arg1: i32, %arg2: i32) -> (i32, i32) {
    %c0_i32 = arith.constant 0 : i32
    return %arg0, %arg1 : i32, i32
  }
}

</mosaic_0001>

<llo_original>
// kernel: tpu_custom_call.1
$region0: #{tpu_custom_call.1}
  #allocation0 [shape = 'u32[]', space=smem, size = 0x4, offset = 0x4, fixed_abs, tag = 'smem constant byte address 0x4 - core index']
  #allocation1 [shape = 'u32[144,128]{1,0:T(1,128)}', space=vmem, size = 0x12000, scoped, tag = 'internal scratch']
  %s0 = inlined_call_operand.hbm [shape: f32[16,32], index: 0, kind: input, shape index: {}]
  %s1 = inlined_call_operand.hbm [shape: f32[32,64], index: 1, kind: input, shape index: {}]
  %s2 = inlined_call_operand.vmem [shape: f32[1,64], index: 2, kind: input, shape index: {}]
  %s3 = inlined_call_operand.hbm [shape: f32[16,64], index: 3, kind: output, shape index: {}]
  %s4 = sld [smem:[#allocation0]]
  $region38: #{tpu_custom_call.1} parent=0
    _
  %s6 = ssub.s32 1, %s4
  %s7 = scalar_select 0, %s6, %s4
  $region1: #{tpu_custom_call.1} parent=0
    #allocation2 [shape = 'u8[8192]{0}', space=vmem, size = 0x2000, scoped, tag = 'input window, operand 0, single buffered']
    #allocation3 [shape = 's32[1]{0}', space=sflag, size = 0x4, scoped, tag = 'scoped memory for tpu_custom_call.1']
    #allocation4 [shape = 's32[1]{0}', space=sflag, size = 0x4, scoped, tag = 'scoped memory for tpu_custom_call.1']
    #allocation5 [shape = 'u8[16384]{0}', space=vmem, size = 0x4000, scoped, tag = 'input window, operand 1, single buffered']
    #allocation6 [shape = 's32[1]{0}', space=sflag, size = 0x4, scoped, tag = 'scoped memory for tpu_custom_call.1']
    #allocation7 [shape = 'u8[8192]{0}', space=vmem, size = 0x2000, scoped, tag = 'output window, operand 0, single buffered']
    %8 = vsyncpa [#allocation3], 0
    %9 = vsyncpa [#allocation6], 0
    %10 = vsyncpa [#allocation4], 0
    // Predicated region
    $region2: #{tpu_custom_call.1} parent=1 // pred_check
      _
    $region3: #{tpu_custom_call.1} parent=1 // pred_check_branch
      %12 = sbr.rel (0) target = $region5
    $region4: #{tpu_custom_call.1} parent=1 // pred_region
      %s14 = ssub.s32 256, 256
      %15 = vsyncadd [#allocation3], %s14
      %s16 = sshll.u32 [#allocation2], 4
      %s17 = int_to_ptr.vmem [resolvable:$true] %s16
      %22 = dma.hbm_to_vmem [thread:$0]  %s0, 256, %s17, [#allocation3], 128, 128, 8
    $region5: #{tpu_custom_call.1} parent=1 // pred_fallthru
      _
    // Predicated region
    $region6: #{tpu_custom_call.1} parent=1 // pred_check
      _
    $region7: #{tpu_custom_call.1} parent=1 // pred_check_branch
      %24 = sbr.rel (0) target = $region9
    $region8: #{tpu_custom_call.1} parent=1 // pred_region
      %s26 = ssub.s32 512, 512
      %27 = vsyncadd [#allocation6], %s26
      %s28 = sshll.u32 [#allocation5], 4
      %s29 = int_to_ptr.vmem [resolvable:$true] %s28
      %34 = dma.hbm_to_vmem [thread:$0]  %s1, 512, %s29, [#allocation6], 128, 128, 8
    $region9: #{tpu_custom_call.1} parent=1 // pred_fallthru
      _
    // Predicated region
    $region10: #{tpu_custom_call.1} parent=1 // pred_check
      _
    $region11: #{tpu_custom_call.1} parent=1 // pred_check_branch
      %36 = sbr.rel (0) target = $region13
    $region12: #{tpu_custom_call.1} parent=1 // pred_region
      _
    $region13: #{tpu_custom_call.1} parent=1 // pred_fallthru
      _
    // Predicated region
    $region14: #{tpu_custom_call.1} parent=1 // pred_check
      _
    $region15: #{tpu_custom_call.1} parent=1 // pred_check_branch
      %38 = sbr.rel (0) target = $region17
    $region16: #{tpu_custom_call.1} parent=1 // pred_region
      %39 = dma.done [#allocation3], 256
    $region17: #{tpu_custom_call.1} parent=1 // pred_fallthru
      _
    // Predicated region
    $region18: #{tpu_custom_call.1} parent=1 // pred_check
      _
    $region19: #{tpu_custom_call.1} parent=1 // pred_check_branch
      %41 = sbr.rel (0) target = $region21
    $region20: #{tpu_custom_call.1} parent=1 // pred_region
      %42 = dma.done [#allocation6], 512
    $region21: #{tpu_custom_call.1} parent=1 // pred_fallthru
      _
    %p43 = scmp.eq.s32.totalorder 0, 0
    // Predicated region
    $region22: #{tpu_custom_call.1} parent=1 // pred_check
      %p44 = pneg %p43
    $region23: #{tpu_custom_call.1} parent=1 // pred_check_branch
      %46 = sbr.rel (%p44) target = $region25
    $region24: #{tpu_custom_call.1} parent=1 // pred_region
      %vm47 = vcmask 523264
      %48 = vst.msk [vmem:[#allocation7] sm:$0xff] %vm47, 0.0
      %49 = vst.msk [vmem:[#allocation7 + $0x8] sm:$0xff] %vm47, 0.0
    $region25: #{tpu_custom_call.1} parent=1 // pred_fallthru
      _
    %v50 = vld [vmem:[#allocation7] sm:$0xff]
    %v51 = vld [vmem:[#allocation7 + $0x8] sm:$0xff]
    %v52 = vld [vmem:[#allocation2] sm:$0xff]
    %v53 = vld [vmem:[#allocation2 + $0x8] sm:$0xff]
    %v54 = vld [vmem:[#allocation5] sm:$0xff]
    %v55 = vld [vmem:[#allocation5 + $0x8] sm:$0xff]
    %v56 = vld [vmem:[#allocation5 + $0x10] sm:$0xff]
    %v57 = vld [vmem:[#allocation5 + $0x18] sm:$0xff]
    %vm58 = vcmask 261120
    %v60 = vsel %vm58, %v52, 0
    %v63 = vsel %vm58, %v53, 0
    %65 = vmatprep.subr.mxu0 0.0
    %66 = vmatpush1.msra.mxu0 %v54
    %67 = vmatprep.subr.mxu0 0.0
    %68 = vmatpush1.msra.mxu0 %v55
    %69 = vmatprep.subr.mxu0 0.0
    %70 = vmatpush1.msra.mxu0 %v56
    %71 = vmatprep.subr.mxu0 0.0
    %72 = vmatpush1.msra.mxu0 %v57
    %73 = vmatprep.subr.mxu0 0.0
    %74 = vmatpush1.msra.mxu0 0.0
    %75 = vmatprep.subr.mxu0 0.0
    %76 = vmatpush1.msra.mxu0 0.0
    %77 = vmatprep.subr.mxu0 0.0
    %78 = vmatpush1.msra.mxu0 0.0
    %79 = vmatprep.subr.mxu0 0.0
    %80 = vmatpush1.msra.mxu0 0.0
    %81 = vmatprep.subr.mxu0 0.0
    %82 = vmatpush1.msra.mxu0 0.0
    %83 = vmatprep.subr.mxu0 0.0
    %84 = vmatpush1.msra.mxu0 0.0
    %85 = vmatprep.subr.mxu0 0.0
    %86 = vmatpush1.msra.mxu0 0.0
    %87 = vmatprep.subr.mxu0 0.0
    %88 = vmatpush1.msra.mxu0 0.0
    %89 = vmatprep.subr.mxu0 0.0
    %90 = vmatpush1.msra.mxu0 0.0
    %91 = vmatprep.subr.mxu0 0.0
    %92 = vmatpush1.msra.mxu0 0.0
    %93 = vmatprep.subr.mxu0 0.0
    %94 = vmatpush1.msra.mxu0 0.0
    %95 = vmatprep.subr.mxu0 0.0
    %96 = vmatpush1.msra.mxu0 0.0
    %97 = vmatprep.subr.mxu0 0.0
    %98 = vmatpush1.msra.mxu0 0.0
    %99 = vmatprep.subr.mxu0 0.0
    %100 = vmatpush1.msra.mxu0 0.0
    %101 = vmatprep.subr.mxu0 0.0
    %102 = vmatpush1.msra.mxu0 0.0
    %103 = vmatprep.subr.mxu0 0.0
    %104 = vmatpush1.msra.mxu0 0.0
    %105 = vmatprep.subr.mxu0 0.0
    %106 = vmatpush1.msra.mxu0 0.0
    %107 = vmatprep.subr.mxu0 0.0
    %108 = vmatpush1.msra.mxu0 0.0
    %109 = vmatprep.subr.mxu0 0.0
    %110 = vmatpush1.msra.mxu0 0.0
    %111 = vmatprep.subr.mxu0 0.0
    %112 = vmatpush1.msra.mxu0 0.0
    %113 = vmatprep.subr.mxu0 0.0
    %114 = vmatpush1.msra.mxu0 0.0
    %115 = vmatprep.subr.mxu0 0.0
    %116 = vmatpush1.msra.mxu0 0.0
    %117 = vmatprep.subr.mxu0 0.0
    %118 = vmatpush1.msra.mxu0 0.0
    %119 = vmatprep.subr.mxu0 0.0
    %120 = vmatpush1.msra.mxu0 0.0
    %121 = vmatprep.subr.mxu0 0.0
    %122 = vmatpush1.msra.mxu0 0.0
    %123 = vmatprep.subr.mxu0 0.0
    %124 = vmatpush1.msra.mxu0 0.0
    %125 = vmatprep.subr.mxu0 0.0
    %126 = vmatpush1.msra.mxu0 0.0
    %127 = vmatprep.subr.mxu0 0.0
    %128 = vmatpush1.msra.mxu0 0.0
    %129 = vmatprep.mubr.f32.mxu0 0.0
    %130 = vmatmul.mubr.f32.gmra.mrb[0].mxu0 %v60
    %v131 = vpop.f32.mrb[0].mxu0
    %v132 = vadd.f32 0.0, %v131
    %v133 = vpop.f32.mrb[0].mxu0
    %134 = vmatprep.mubr.f32.mxu0 0.0
    %135 = vmatmul.mubr.f32.gmra.mrb[0].mxu0 %v63
    %v136 = vpop.f32.mrb[0].mxu0
    %v137 = vadd.f32 0.0, %v136
    %v138 = vpop.f32.mrb[0].mxu0
    %139 = vdwg.mxu0
    %v140 = vadd.f32 %v50, %v132
    %v141 = vadd.f32 %v51, %v137
    %vm142 = vcmask 523264
    %143 = vst.msk [vmem:[#allocation7] sm:$0xff] %vm142, %v140
    %144 = vst.msk [vmem:[#allocation7 + $0x8] sm:$0xff] %vm142, %v141
    // Predicated region
    $region26: #{tpu_custom_call.1} parent=1 // pred_check
      %p145 = pneg %p43
    $region27: #{tpu_custom_call.1} parent=1 // pred_check_branch
      %147 = sbr.rel (%p145) target = $region29
    $region28: #{tpu_custom_call.1} parent=1 // pred_region
      %v148 = vld [vmem:[#allocation7] sm:$0xff]
      %v149 = vld [vmem:[#allocation7 + $0x8] sm:$0xff]
      %v150 = vld [vmem:[%s2] sm:$0x1]
      %v152 = vlaneseq
      %v153 = vshrl.u32 %v152, 7
      %v154 = vsub.s32 0, %v153
      %v155 = vrot.slane %v150, %v154
      %v157 = vadd.f32 %v148, %v155
      %v158 = vadd.f32 %v149, %v155
      %159 = vst.msk [vmem:[#allocation7] sm:$0xff] %vm142, %v157
      %160 = vst.msk [vmem:[#allocation7 + $0x8] sm:$0xff] %vm142, %v158
    $region29: #{tpu_custom_call.1} parent=1 // pred_fallthru
      _
    // Predicated region
    $region30: #{tpu_custom_call.1} parent=1 // pred_check
      _
    $region31: #{tpu_custom_call.1} parent=1 // pred_check_branch
      %162 = sbr.rel (0) target = $region33
    $region32: #{tpu_custom_call.1} parent=1 // pred_region
      %s164 = ssub.s32 256, 256
      %165 = vsyncadd [#allocation4], %s164
      %s166 = sshll.u32 [#allocation7], 4
      %s167 = int_to_ptr.vmem [resolvable:$true] %s166
      %172 = dma.vmem_to_hbm [thread:$0]  %s167, 256, %s3, [#allocation4], 128, 128, 8
    $region33: #{tpu_custom_call.1} parent=1 // pred_fallthru
      _
    // Predicated region
    $region34: #{tpu_custom_call.1} parent=1 // pred_check
      _
    $region35: #{tpu_custom_call.1} parent=1 // pred_check_branch
      %174 = sbr.rel (0) target = $region37
    $region36: #{tpu_custom_call.1} parent=1 // pred_region
      %175 = dma.done [#allocation4], 256
    $region37: #{tpu_custom_call.1} parent=1 // pred_fallthru
      _
    %176 = vsyncpa [#allocation3], 1
    %177 = vsyncpa [#allocation6], 1
    %178 = vsyncpa [#allocation4], 1

</llo_original>
